<compile_context>
chip_gen: v7x
topology: tpu7x:2x2x1
jax: 0.10.0
libtpu: 0.0.40
codegen_flags: <defaults>
</compile_context>

<pallas_src>
import functools
import math

import jax
import jax.numpy as jnp
from jax import lax
from jax.experimental import pallas as pl
from jax.experimental.pallas import tpu as pltpu


# ----------------------------- Pallas kernel ------------------------------- #

def _gcn(adj, dinv, z, w, b):
    """GCNConv:  dinv * ((A+I) @ (dinv * (Z @ W))) + b, with (A+I)@Y = adj@Y + Y."""
    zw = jnp.dot(z, w, preferred_element_type=jnp.float32)
    y = dinv * zw
    return dinv * (jnp.dot(adj, y, preferred_element_type=jnp.float32) + y) + b


def _gnn_kernel(adj_ref, x_ref, dw_ref, pw_ref, bw_ref, uw_ref, fw_ref,
                bias_ref, o_ref):
    f32 = jnp.float32
    n = adj_ref.shape[0]
    h = dw_ref.shape[1]
    k, out_c = o_ref.shape

    adj = adj_ref[...]                                          # (n, n)
    bias = bias_ref[...]                                        # (4, max(2h, out)) packed biases
    db = bias[0:1, 0:h]
    bb = bias[1:2, 0:2 * h]
    ub = bias[2:3, 0:h]
    fb = bias[3:4, 0:out_c]

    # ---------------- stage 1: down GCNConv ----------------
    # degree of (A + I) without materializing it
    deg = jnp.sum(adj, axis=1, keepdims=True) + f32(1.0)        # (n, 1), always >= 1
    dinv = lax.rsqrt(deg)
    x_down = _gcn(adj, dinv, x_ref[...], dw_ref[...], db)       # (n, h)

    # ---------------- stage 2: TopKPooling (fully in-kernel) ----------------
    pw = pw_ref[...]                                            # (1, h)
    inv_norm = lax.rsqrt(jnp.sum(pw * pw))
    z_col = lax.dot_general(x_down, pw, (((1,), (1,)), ((), ())),
                            preferred_element_type=f32)        # (n, 1) raw projection
    s_col = jnp.tanh(z_col * inv_norm)                          # (n, 1) node scores
    # lane-oriented copy of the SAME values (bitwise identical -> consistent ranks)
    s_row = jnp.transpose(s_col)                                # (1, n)

    # rank[j] = #nodes strictly ahead of node j (higher score; ties -> lower index
    # first, matching lax.top_k / torch.topk).  rank is a permutation of 0..n-1,
    # node j is kept iff rank[j] < k.
    m_idx = lax.broadcasted_iota(jnp.int32, (n, n), 0)
    j_idx = lax.broadcasted_iota(jnp.int32, (n, n), 1)
    beats = (s_col > s_row) | ((s_col == s_row) & (m_idx < j_idx))   # (n, n)
    rank = jnp.sum(beats.astype(f32), axis=0, keepdims=True).astype(jnp.int32)  # (1, n)

    # selection matrix: sel[i, j] = 1 iff node j has the i-th highest score.
    # All data-dependent gathers become exact MXU matmuls (one nonzero per row/col).
    sel = (lax.broadcasted_iota(jnp.int32, (k, n), 0) == rank).astype(f32)       # (k, n)

    skip_p = jnp.dot(sel, x_down, preferred_element_type=f32)   # (k, h)  == x_down[perm]
    gate = jnp.dot(sel, s_col, preferred_element_type=f32)      # (k, 1)  == score[perm]
    x_p = skip_p * gate                                         # gated pooled features
    adj_p = lax.dot_general(jnp.dot(sel, adj, preferred_element_type=f32), sel,
                            (((1,), (1,)), ((), ())),
                            preferred_element_type=f32)        # (k, k) == adj[perm][:, perm]

    # ---------------- stage 3: bottleneck -> up (skip concat) -> final ----------------
    deg_p = jnp.sum(adj_p, axis=1, keepdims=True) + f32(1.0)
    dinv_p = lax.rsqrt(deg_p)

    xb = _gcn(adj_p, dinv_p, x_p, bw_ref[...], bb)              # (k, 2h)

    # up conv on concat([xb, skip_p], 1):  cat @ W == xb @ W[:2h] + skip @ W[2h:]
    uw = uw_ref[...]                                            # (3h, h), split statically
    zw = (jnp.dot(xb, uw[0:2 * h, :], preferred_element_type=f32)
          + jnp.dot(skip_p, uw[2 * h:3 * h, :], preferred_element_type=f32))
    y = dinv_p * zw
    xu = dinv_p * (jnp.dot(adj_p, y, preferred_element_type=f32) + y) + ub   # (k, h)

    o_ref[...] = _gcn(adj_p, dinv_p, xu, fw_ref[...], fb)       # (k, out)


# ------------------------------ call wrapper -------------------------------- #

_VMEM = pl.BlockSpec(memory_space=pltpu.MemorySpace.VMEM)


@functools.partial(jax.jit, static_argnames=("ratio",))
def gnn_forward(params, x, adj, ratio=0.5):
    n = x.shape[0]
    k = int(math.ceil(ratio * n))
    out_c = params["final_w"].shape[1]
    return pl.pallas_call(
        _gnn_kernel,
        out_shape=jax.ShapeDtypeStruct((k, out_c), jnp.float32),
        in_specs=[_VMEM] * 8,
        out_specs=_VMEM,
        compiler_params=pltpu.CompilerParams(vmem_limit_bytes=32 * 1024 * 1024),
    )(adj, x, params["down_w"], params["pool_w"], params["bott_w"],
      params["up_w"], params["final_w"], params["bias_pack"])


# ------------------------------ params / ref -------------------------------- #

def glorot(key, shape):
    fan_in, fan_out = shape
    limit = math.sqrt(6.0 / (fan_in + fan_out))
    return jax.random.uniform(key, shape, jnp.float32, -limit, limit)


def init_params(key, node_in, hidden, out_features):
    keys = jax.random.split(key, 5)
    h = hidden
    down_b = jnp.zeros((1, h), jnp.float32)
    bott_b = jnp.zeros((1, 2 * h), jnp.float32)
    up_b = jnp.zeros((1, h), jnp.float32)
    final_b = jnp.zeros((1, out_features), jnp.float32)

    # pack the four biases into one (4, max(2h,out)) array -> single DMA in-kernel
    width = max(2 * h, out_features)
    bias_pack = jnp.zeros((4, width), jnp.float32)
    bias_pack = bias_pack.at[0, :h].set(down_b[0])
    bias_pack = bias_pack.at[1, :2 * h].set(bott_b[0])
    bias_pack = bias_pack.at[2, :h].set(up_b[0])
    bias_pack = bias_pack.at[3, :out_features].set(final_b[0])

    return {
        "down_w": glorot(keys[0], (node_in, h)),
        "pool_w": jax.random.uniform(keys[1], (1, h), jnp.float32,
                                     -1.0 / math.sqrt(h), 1.0 / math.sqrt(h)),
        "bott_w": glorot(keys[2], (h, 2 * h)),
        "up_w": glorot(keys[3], (3 * h, h)),        # concat width 3h (see TODO above)
        "final_w": glorot(keys[4], (h, out_features)),
        "bias_pack": bias_pack,
        # individual biases kept only for the pure-JAX reference check
        "down_b": down_b, "bott_b": bott_b, "up_b": up_b, "final_b": final_b,
    }


def gnn_reference(params, x, adj, ratio=0.5):
    """Pure-JAX reference with identical semantics (for correctness check)."""
    def gcn(a, z, w, b):
        deg = jnp.sum(a, axis=1, keepdims=True) + 1.0
        dinv = lax.rsqrt(deg)
        y = dinv * (z @ w)
        return dinv * (a @ y + y) + b

    h = params["down_w"].shape[1]
    x_down = gcn(adj, x, params["down_w"], params["down_b"])
    pw = params["pool_w"]
    score = jnp.tanh((x_down @ pw[0]) / jnp.sqrt(jnp.sum(pw * pw)))
    k = int(math.ceil(ratio * x.shape[0]))
    _, perm = lax.top_k(score, k)
    skip_p = x_down[perm]
    x_p = skip_p * score[perm][:, None]
    adj_p = adj[perm[:, None], perm[None, :]]
    xb = gcn(adj_p, x_p, params["bott_w"], params["bott_b"])
    xu = gcn(adj_p, jnp.concatenate([xb, skip_p], axis=1),
             params["up_w"], params["up_b"])
    return gcn(adj_p, xu, params["final_w"], params["final_b"])


# --------------------------------- main ------------------------------------ #

if __name__ == "__main__":
    key = jax.random.PRNGKey(0)
    k_x, k_e, k_p = jax.random.split(key, 3)

    N = 16                 # nodes
    NODE_IN = 4            # node_in_features
    EDGE_IN = 4            # edge_in_features (edge_attr unused by the forward)
    HIDDEN = 8             # hidden_channels
    OUT = 4                # out_features

    x = jax.random.normal(k_x, (N, NODE_IN), jnp.float32)

    # bidirectional ring graph: [2, 2N] int32, row0 = source, row1 = target
    src = jnp.arange(N, dtype=jnp.int32)
    dst = (src + 1) % N
    edge_index = jnp.stack([jnp.concatenate([src, dst]),
                            jnp.concatenate([dst, src])], axis=0)
    edge_attr = jax.random.normal(k_e, (edge_index.shape[1], EDGE_IN), jnp.float32)  # unused

    # dense adjacency: adj[target, source] += 1
    adj = jnp.zeros((N, N), jnp.float32).at[edge_index[1], edge_index[0]].add(1.0)

    params = init_params(k_p, NODE_IN, HIDDEN, OUT)

    out = gnn_forward(params, x, adj)
    out = jax.block_until_ready(out)

    ref = gnn_reference(params, x, adj)
    assert out.shape == (math.ceil(0.5 * N), OUT)
    assert bool(jnp.all(jnp.isfinite(out)))
    assert bool(jnp.allclose(out, ref, atol=1e-4, rtol=1e-4))
    print("KERNEL_OK")
</pallas_src>

<mosaic_0001>
module attributes {stable_mosaic.version = 11 : i64} {
  func.func @_gnn_kernel(%arg0: memref<16x16xf32, #tpu.memory_space<vmem>>, %arg1: memref<16x4xf32, #tpu.memory_space<vmem>>, %arg2: memref<4x8xf32, #tpu.memory_space<vmem>>, %arg3: memref<1x8xf32, #tpu.memory_space<vmem>>, %arg4: memref<8x16xf32, #tpu.memory_space<vmem>>, %arg5: memref<24x8xf32, #tpu.memory_space<vmem>>, %arg6: memref<8x4xf32, #tpu.memory_space<vmem>>, %arg7: memref<4x16xf32, #tpu.memory_space<vmem>>, %arg8: memref<8x4xf32, #tpu.memory_space<vmem>>) attributes {dimension_semantics = [], scalar_prefetch = 0 : i64, scratch_operands = 0 : i64, tpu.core_type = #tpu.core_type<tc>} {
    %c0 = arith.constant 0 : index
    %c0_0 = arith.constant 0 : index
    %0 = vector.load %arg0[%c0, %c0_0] : memref<16x16xf32, #tpu.memory_space<vmem>>, vector<16x16xf32>
    %c0_1 = arith.constant 0 : index
    %c0_2 = arith.constant 0 : index
    %1 = vector.load %arg7[%c0_1, %c0_2] : memref<4x16xf32, #tpu.memory_space<vmem>>, vector<4x16xf32>
    %2 = vector.extract_strided_slice %1 {offsets = [0, 0], sizes = [1, 8], strides = [1, 1]} : vector<4x16xf32> to vector<1x8xf32>
    %3 = vector.extract_strided_slice %1 {offsets = [1, 0], sizes = [1, 16], strides = [1, 1]} : vector<4x16xf32> to vector<1x16xf32>
    %4 = vector.extract_strided_slice %1 {offsets = [2, 0], sizes = [1, 8], strides = [1, 1]} : vector<4x16xf32> to vector<1x8xf32>
    %5 = vector.extract_strided_slice %1 {offsets = [3, 0], sizes = [1, 4], strides = [1, 1]} : vector<4x16xf32> to vector<1x4xf32>
    %cst = arith.constant dense<0.000000e+00> : vector<16xf32>
    %6 = vector.multi_reduction <add>, %0, %cst [1] : vector<16x16xf32> to vector<16xf32>
    %7 = vector.shape_cast %6 : vector<16xf32> to vector<16x1xf32>
    %cst_3 = arith.constant 1.000000e+00 : f32
    %8 = vector.broadcast %cst_3 : f32 to vector<16x1xf32>
    %9 = arith.addf %7, %8 : vector<16x1xf32>
    %10 = math.rsqrt %9 : vector<16x1xf32>
    %c0_4 = arith.constant 0 : index
    %c0_5 = arith.constant 0 : index
    %11 = vector.load %arg1[%c0_4, %c0_5] : memref<16x4xf32, #tpu.memory_space<vmem>>, vector<16x4xf32>
    %c0_6 = arith.constant 0 : index
    %c0_7 = arith.constant 0 : index
    %12 = vector.load %arg2[%c0_6, %c0_7] : memref<4x8xf32, #tpu.memory_space<vmem>>, vector<4x8xf32>
    %cst_8 = arith.constant dense<0.000000e+00> : vector<16x8xf32>
    %13 = tpu.matmul %11, %12, %cst_8 {dimension_numbers = #tpu.dot_dimension_numbers<[1], [0], [0], [1], [0, 0, 1, 1], [], []>} : vector<16x4xf32>, vector<4x8xf32>, vector<16x8xf32> -> vector<16x8xf32>
    %14 = vector.broadcast %10 : vector<16x1xf32> to vector<16x8xf32>
    %15 = arith.mulf %14, %13 : vector<16x8xf32>
    %cst_9 = arith.constant dense<0.000000e+00> : vector<16x8xf32>
    %16 = tpu.matmul %0, %15, %cst_9 {dimension_numbers = #tpu.dot_dimension_numbers<[1], [0], [0], [1], [0, 0, 1, 1], [], []>} : vector<16x16xf32>, vector<16x8xf32>, vector<16x8xf32> -> vector<16x8xf32>
    %17 = arith.addf %16, %15 : vector<16x8xf32>
    %18 = vector.broadcast %10 : vector<16x1xf32> to vector<16x8xf32>
    %19 = arith.mulf %18, %17 : vector<16x8xf32>
    %20 = vector.broadcast %2 : vector<1x8xf32> to vector<16x8xf32>
    %21 = arith.addf %19, %20 : vector<16x8xf32>
    %c0_10 = arith.constant 0 : index
    %c0_11 = arith.constant 0 : index
    %22 = vector.load %arg3[%c0_10, %c0_11] : memref<1x8xf32, #tpu.memory_space<vmem>>, vector<1x8xf32>
    %23 = arith.mulf %22, %22 : vector<1x8xf32>
    %24 = vector.shape_cast %23 : vector<1x8xf32> to vector<1x1x8xf32>
    %cst_12 = arith.constant dense<0.000000e+00> : vector<1xf32>
    %25 = vector.multi_reduction <add>, %24, %cst_12 [1, 2] : vector<1x1x8xf32> to vector<1xf32>
    %26 = vector.shape_cast %25 : vector<1xf32> to vector<1x1x1xf32>
    %27 = vector.extract %26[0, 0, 0] : f32 from vector<1x1x1xf32>
    %28 = math.rsqrt %27 : f32
    %cst_13 = arith.constant dense<0.000000e+00> : vector<16x1xf32>
    %29 = tpu.matmul %21, %22, %cst_13 {dimension_numbers = #tpu.dot_dimension_numbers<[1], [1], [0], [0], [0, 0, 1, 0], [], []>} : vector<16x8xf32>, vector<1x8xf32>, vector<16x1xf32> -> vector<16x1xf32>
    %30 = vector.broadcast %28 : f32 to vector<16x1xf32>
    %31 = arith.mulf %29, %30 : vector<16x1xf32>
    %32 = math.tanh %31 : vector<16x1xf32>
    %33 = tpu.transpose %32, [1, 0] : vector<16x1xf32> -> vector<1x16xf32>
    %34 = tpu.iota {dimensions = array<i32: 0>} : vector<16x16xi32>
    %35 = tpu.iota {dimensions = array<i32: 1>} : vector<16x16xi32>
    %36 = vector.broadcast %32 : vector<16x1xf32> to vector<16x16xf32>
    %37 = vector.broadcast %33 : vector<1x16xf32> to vector<16x16xf32>
    %38 = arith.cmpf ogt, %36, %37 : vector<16x16xf32>
    %39 = vector.broadcast %32 : vector<16x1xf32> to vector<16x16xf32>
    %40 = vector.broadcast %33 : vector<1x16xf32> to vector<16x16xf32>
    %41 = arith.cmpf oeq, %39, %40 : vector<16x16xf32>
    %42 = arith.cmpi slt, %34, %35 : vector<16x16xi32>
    %43 = arith.andi %41, %42 : vector<16x16xi1>
    %44 = arith.ori %38, %43 : vector<16x16xi1>
    %45 = arith.extui %44 : vector<16x16xi1> to vector<16x16xi32>
    %46 = arith.sitofp %45 : vector<16x16xi32> to vector<16x16xf32>
    %cst_14 = arith.constant dense<0.000000e+00> : vector<16xf32>
    %47 = vector.multi_reduction <add>, %46, %cst_14 [0] : vector<16x16xf32> to vector<16xf32>
    %48 = vector.shape_cast %47 : vector<16xf32> to vector<1x16xf32>
    %49 = arith.fptosi %48 : vector<1x16xf32> to vector<1x16xi32>
    %50 = tpu.iota {dimensions = array<i32: 0>} : vector<8x16xi32>
    %51 = vector.broadcast %49 : vector<1x16xi32> to vector<8x16xi32>
    %52 = arith.cmpi eq, %50, %51 : vector<8x16xi32>
    %53 = arith.extui %52 : vector<8x16xi1> to vector<8x16xi32>
    %54 = arith.sitofp %53 : vector<8x16xi32> to vector<8x16xf32>
    %cst_15 = arith.constant dense<0.000000e+00> : vector<8x8xf32>
    %55 = tpu.matmul %54, %21, %cst_15 {dimension_numbers = #tpu.dot_dimension_numbers<[1], [0], [0], [1], [0, 0, 1, 1], [], []>} : vector<8x16xf32>, vector<16x8xf32>, vector<8x8xf32> -> vector<8x8xf32>
    %cst_16 = arith.constant dense<0.000000e+00> : vector<8x1xf32>
    %56 = tpu.matmul %54, %32, %cst_16 {dimension_numbers = #tpu.dot_dimension_numbers<[1], [0], [0], [1], [0, 0, 1, 1], [], []>} : vector<8x16xf32>, vector<16x1xf32>, vector<8x1xf32> -> vector<8x1xf32>
    %57 = vector.broadcast %56 : vector<8x1xf32> to vector<8x8xf32>
    %58 = arith.mulf %55, %57 : vector<8x8xf32>
    %cst_17 = arith.constant dense<0.000000e+00> : vector<8x16xf32>
    %59 = tpu.matmul %54, %0, %cst_17 {dimension_numbers = #tpu.dot_dimension_numbers<[1], [0], [0], [1], [0, 0, 1, 1], [], []>} : vector<8x16xf32>, vector<16x16xf32>, vector<8x16xf32> -> vector<8x16xf32>
    %cst_18 = arith.constant dense<0.000000e+00> : vector<8x8xf32>
    %60 = tpu.matmul %59, %54, %cst_18 {dimension_numbers = #tpu.dot_dimension_numbers<[1], [1], [0], [0], [0, 0, 1, 0], [], []>} : vector<8x16xf32>, vector<8x16xf32>, vector<8x8xf32> -> vector<8x8xf32>
    %cst_19 = arith.constant dense<0.000000e+00> : vector<8xf32>
    %61 = vector.multi_reduction <add>, %60, %cst_19 [1] : vector<8x8xf32> to vector<8xf32>
    %62 = vector.shape_cast %61 : vector<8xf32> to vector<8x1xf32>
    %cst_20 = arith.constant 1.000000e+00 : f32
    %63 = vector.broadcast %cst_20 : f32 to vector<8x1xf32>
    %64 = arith.addf %62, %63 : vector<8x1xf32>
    %65 = math.rsqrt %64 : vector<8x1xf32>
    %c0_21 = arith.constant 0 : index
    %c0_22 = arith.constant 0 : index
    %66 = vector.load %arg4[%c0_21, %c0_22] : memref<8x16xf32, #tpu.memory_space<vmem>>, vector<8x16xf32>
    %cst_23 = arith.constant dense<0.000000e+00> : vector<8x16xf32>
    %67 = tpu.matmul %58, %66, %cst_23 {dimension_numbers = #tpu.dot_dimension_numbers<[1], [0], [0], [1], [0, 0, 1, 1], [], []>} : vector<8x8xf32>, vector<8x16xf32>, vector<8x16xf32> -> vector<8x16xf32>
    %68 = vector.broadcast %65 : vector<8x1xf32> to vector<8x16xf32>
    %69 = arith.mulf %68, %67 : vector<8x16xf32>
    %cst_24 = arith.constant dense<0.000000e+00> : vector<8x16xf32>
    %70 = tpu.matmul %60, %69, %cst_24 {dimension_numbers = #tpu.dot_dimension_numbers<[1], [0], [0], [1], [0, 0, 1, 1], [], []>} : vector<8x8xf32>, vector<8x16xf32>, vector<8x16xf32> -> vector<8x16xf32>
    %71 = arith.addf %70, %69 : vector<8x16xf32>
    %72 = vector.broadcast %65 : vector<8x1xf32> to vector<8x16xf32>
    %73 = arith.mulf %72, %71 : vector<8x16xf32>
    %74 = vector.broadcast %3 : vector<1x16xf32> to vector<8x16xf32>
    %75 = arith.addf %73, %74 : vector<8x16xf32>
    %c0_25 = arith.constant 0 : index
    %c0_26 = arith.constant 0 : index
    %76 = vector.load %arg5[%c0_25, %c0_26] : memref<24x8xf32, #tpu.memory_space<vmem>>, vector<24x8xf32>
    %77 = vector.extract_strided_slice %76 {offsets = [0, 0], sizes = [16, 8], strides = [1, 1]} : vector<24x8xf32> to vector<16x8xf32>
    %cst_27 = arith.constant dense<0.000000e+00> : vector<8x8xf32>
    %78 = tpu.matmul %75, %77, %cst_27 {dimension_numbers = #tpu.dot_dimension_numbers<[1], [0], [0], [1], [0, 0, 1, 1], [], []>} : vector<8x16xf32>, vector<16x8xf32>, vector<8x8xf32> -> vector<8x8xf32>
    %79 = vector.extract_strided_slice %76 {offsets = [16, 0], sizes = [8, 8], strides = [1, 1]} : vector<24x8xf32> to vector<8x8xf32>
    %cst_28 = arith.constant dense<0.000000e+00> : vector<8x8xf32>
    %80 = tpu.matmul %55, %79, %cst_28 {dimension_numbers = #tpu.dot_dimension_numbers<[1], [0], [0], [1], [0, 0, 1, 1], [], []>} : vector<8x8xf32>, vector<8x8xf32>, vector<8x8xf32> -> vector<8x8xf32>
    %81 = arith.addf %78, %80 : vector<8x8xf32>
    %82 = vector.broadcast %65 : vector<8x1xf32> to vector<8x8xf32>
    %83 = arith.mulf %82, %81 : vector<8x8xf32>
    %cst_29 = arith.constant dense<0.000000e+00> : vector<8x8xf32>
    %84 = tpu.matmul %60, %83, %cst_29 {dimension_numbers = #tpu.dot_dimension_numbers<[1], [0], [0], [1], [0, 0, 1, 1], [], []>} : vector<8x8xf32>, vector<8x8xf32>, vector<8x8xf32> -> vector<8x8xf32>
    %85 = arith.addf %84, %83 : vector<8x8xf32>
    %86 = vector.broadcast %65 : vector<8x1xf32> to vector<8x8xf32>
    %87 = arith.mulf %86, %85 : vector<8x8xf32>
    %88 = vector.broadcast %4 : vector<1x8xf32> to vector<8x8xf32>
    %89 = arith.addf %87, %88 : vector<8x8xf32>
    %c0_30 = arith.constant 0 : index
    %c0_31 = arith.constant 0 : index
    %90 = vector.load %arg6[%c0_30, %c0_31] : memref<8x4xf32, #tpu.memory_space<vmem>>, vector<8x4xf32>
    %cst_32 = arith.constant dense<0.000000e+00> : vector<8x4xf32>
    %91 = tpu.matmul %89, %90, %cst_32 {dimension_numbers = #tpu.dot_dimension_numbers<[1], [0], [0], [1], [0, 0, 1, 1], [], []>} : vector<8x8xf32>, vector<8x4xf32>, vector<8x4xf32> -> vector<8x4xf32>
    %92 = vector.broadcast %65 : vector<8x1xf32> to vector<8x4xf32>
    %93 = arith.mulf %92, %91 : vector<8x4xf32>
    %cst_33 = arith.constant dense<0.000000e+00> : vector<8x4xf32>
    %94 = tpu.matmul %60, %93, %cst_33 {dimension_numbers = #tpu.dot_dimension_numbers<[1], [0], [0], [1], [0, 0, 1, 1], [], []>} : vector<8x8xf32>, vector<8x4xf32>, vector<8x4xf32> -> vector<8x4xf32>
    %95 = arith.addf %94, %93 : vector<8x4xf32>
    %96 = vector.broadcast %65 : vector<8x1xf32> to vector<8x4xf32>
    %97 = arith.mulf %96, %95 : vector<8x4xf32>
    %98 = vector.broadcast %5 : vector<1x4xf32> to vector<8x4xf32>
    %99 = arith.addf %97, %98 : vector<8x4xf32>
    %c0_34 = arith.constant 0 : index
    %c0_35 = arith.constant 0 : index
    %100 = vector.load %arg8[%c0_34, %c0_35] : memref<8x4xf32, #tpu.memory_space<vmem>>, vector<8x4xf32>
    tpu.vector_store %arg8[%c0_34, %c0_35], %99 {strides = array<i32>} : memref<8x4xf32, #tpu.memory_space<vmem>>, vector<8x4xf32>,
    return
  }
}

</mosaic_0001>

<llo_original>
// kernel: gnn_forward.1
$region0: #{gnn_forward.1}
  #allocation0 [shape = 'u32[]', space=smem, size = 0x4, offset = 0x4, fixed_abs, tag = 'smem constant byte address 0x4 - core index']
  #allocation1 [shape = 'u32[144,128]{1,0:T(1,128)}', space=vmem, size = 0x12000, scoped, tag = 'internal scratch']
  %s0 = inlined_call_operand.vmem [shape: f32[16,16], index: 0, kind: input, shape index: {}]
  %s1 = inlined_call_operand.vmem [shape: f32[16,4], index: 1, kind: input, shape index: {}]
  %s2 = inlined_call_operand.vmem [shape: f32[4,8], index: 2, kind: input, shape index: {}]
  %s3 = inlined_call_operand.vmem [shape: f32[1,8], index: 3, kind: input, shape index: {}]
  %s4 = inlined_call_operand.vmem [shape: f32[8,16], index: 4, kind: input, shape index: {}]
  %s5 = inlined_call_operand.vmem [shape: f32[24,8], index: 5, kind: input, shape index: {}]
  %s6 = inlined_call_operand.vmem [shape: f32[8,4], index: 6, kind: input, shape index: {}]
  %s7 = inlined_call_operand.vmem [shape: f32[4,16], index: 7, kind: input, shape index: {}]
  %s8 = inlined_call_operand.vmem [shape: f32[8,4], index: 8, kind: output, shape index: {}]
  %s9 = sld [smem:[#allocation0]]
  $region42: #{gnn_forward.1} parent=0
    _
  %s11 = ssub.s32 1, %s9
  %s12 = scalar_select 0, %s11, %s9
  // Predicated region
  $region2: #{gnn_forward.1} parent=0 // pred_check
    _
  $region3: #{gnn_forward.1} parent=0 // pred_check_branch
    %14 = sbr.rel (0) target = $region5
  $region4: #{gnn_forward.1} parent=0 // pred_region
    _
  $region5: #{gnn_forward.1} parent=0 // pred_fallthru
    _
  // Predicated region
  $region6: #{gnn_forward.1} parent=0 // pred_check
    _
  $region7: #{gnn_forward.1} parent=0 // pred_check_branch
    %16 = sbr.rel (0) target = $region9
  $region8: #{gnn_forward.1} parent=0 // pred_region
    _
  $region9: #{gnn_forward.1} parent=0 // pred_fallthru
    _
  // Predicated region
  $region10: #{gnn_forward.1} parent=0 // pred_check
    _
  $region11: #{gnn_forward.1} parent=0 // pred_check_branch
    %18 = sbr.rel (0) target = $region13
  $region12: #{gnn_forward.1} parent=0 // pred_region
    _
  $region13: #{gnn_forward.1} parent=0 // pred_fallthru
    _
  // Predicated region
  $region14: #{gnn_forward.1} parent=0 // pred_check
    _
  $region15: #{gnn_forward.1} parent=0 // pred_check_branch
    %20 = sbr.rel (0) target = $region17
  $region16: #{gnn_forward.1} parent=0 // pred_region
    _
  $region17: #{gnn_forward.1} parent=0 // pred_fallthru
    _
  // Predicated region
  $region18: #{gnn_forward.1} parent=0 // pred_check
    _
  $region19: #{gnn_forward.1} parent=0 // pred_check_branch
    %22 = sbr.rel (0) target = $region21
  $region20: #{gnn_forward.1} parent=0 // pred_region
    _
  $region21: #{gnn_forward.1} parent=0 // pred_fallthru
    _
  // Predicated region
  $region22: #{gnn_forward.1} parent=0 // pred_check
    _
  $region23: #{gnn_forward.1} parent=0 // pred_check_branch
    %24 = sbr.rel (0) target = $region25
  $region24: #{gnn_forward.1} parent=0 // pred_region
    _
  $region25: #{gnn_forward.1} parent=0 // pred_fallthru
    _
  // Predicated region
  $region26: #{gnn_forward.1} parent=0 // pred_check
    _
  $region27: #{gnn_forward.1} parent=0 // pred_check_branch
    %26 = sbr.rel (0) target = $region29
  $region28: #{gnn_forward.1} parent=0 // pred_region
    _
  $region29: #{gnn_forward.1} parent=0 // pred_fallthru
    _
  // Predicated region
  $region30: #{gnn_forward.1} parent=0 // pred_check
    _
  $region31: #{gnn_forward.1} parent=0 // pred_check_branch
    %28 = sbr.rel (0) target = $region33
  $region32: #{gnn_forward.1} parent=0 // pred_region
    _
  $region33: #{gnn_forward.1} parent=0 // pred_fallthru
    _
  %v29 = vld [vmem:[%s0] sm:$0xff]
  %v30 = vld [vmem:[%s0 + $0x8] sm:$0xff]
  %v31 = vld [vmem:[%s7] sm:$0xf]
  %vm32 = vcmask 130048
  %v33 = vsel %vm32, %v29, 0.0
  %34 = vadd.xlane.f32.xlu0 %v33
  %v35 = vpop.xlane.xlu0 %34
  %v36 = vsel %vm32, %v30, 0.0
  %37 = vadd.xlane.f32.xlu0 %v36
  %v38 = vpop.xlane.xlu0 %37
  %v39 = vadd.f32 %v35, 1.0
  %v40 = vadd.f32 %v38, 1.0
  %v41 = vrsqrt.pop %v39
  %v42 = vrsqrt.pop %v40
  %v43 = vld [vmem:[%s1] sm:$0xff]
  %v44 = vld [vmem:[%s1 + $0x8] sm:$0xff]
  %v45 = vld [vmem:[%s2] sm:$0xf]
  %vm46 = vcmask 31744
  %v48 = vsel %vm46, %v43, 0
  %v51 = vsel %vm46, %v44, 0
  %vm53 = vcmask 1043456
  %v55 = vsel %vm53, %v45, 0
  %57 = vmatprep.subr.mxu0 0.0
  %58 = vmatpush1.msra.mxu0 %v55
  %59 = vmatprep.subr.mxu0 0.0
  %60 = vmatpush1.msra.mxu0 0.0
  %61 = vmatprep.subr.mxu0 0.0
  %62 = vmatpush1.msra.mxu0 0.0
  %63 = vmatprep.subr.mxu0 0.0
  %64 = vmatpush1.msra.mxu0 0.0
  %65 = vmatprep.subr.mxu0 0.0
  %66 = vmatpush1.msra.mxu0 0.0
  %67 = vmatprep.subr.mxu0 0.0
  %68 = vmatpush1.msra.mxu0 0.0
  %69 = vmatprep.subr.mxu0 0.0
  %70 = vmatpush1.msra.mxu0 0.0
  %71 = vmatprep.subr.mxu0 0.0
  %72 = vmatpush1.msra.mxu0 0.0
  %73 = vmatprep.subr.mxu0 0.0
  %74 = vmatpush1.msra.mxu0 0.0
  %75 = vmatprep.subr.mxu0 0.0
  %76 = vmatpush1.msra.mxu0 0.0
  %77 = vmatprep.subr.mxu0 0.0
  %78 = vmatpush1.msra.mxu0 0.0
  %79 = vmatprep.subr.mxu0 0.0
  %80 = vmatpush1.msra.mxu0 0.0
  %81 = vmatprep.subr.mxu0 0.0
  %82 = vmatpush1.msra.mxu0 0.0
  %83 = vmatprep.subr.mxu0 0.0
  %84 = vmatpush1.msra.mxu0 0.0
  %85 = vmatprep.subr.mxu0 0.0
  %86 = vmatpush1.msra.mxu0 0.0
  %87 = vmatprep.subr.mxu0 0.0
  %88 = vmatpush1.msra.mxu0 0.0
  %89 = vmatprep.subr.mxu0 0.0
  %90 = vmatpush1.msra.mxu0 0.0
  %91 = vmatprep.subr.mxu0 0.0
  %92 = vmatpush1.msra.mxu0 0.0
  %93 = vmatprep.subr.mxu0 0.0
  %94 = vmatpush1.msra.mxu0 0.0
  %95 = vmatprep.subr.mxu0 0.0
  %96 = vmatpush1.msra.mxu0 0.0
  %97 = vmatprep.subr.mxu0 0.0
  %98 = vmatpush1.msra.mxu0 0.0
  %99 = vmatprep.subr.mxu0 0.0
  %100 = vmatpush1.msra.mxu0 0.0
  %101 = vmatprep.subr.mxu0 0.0
  %102 = vmatpush1.msra.mxu0 0.0
  %103 = vmatprep.subr.mxu0 0.0
  %104 = vmatpush1.msra.mxu0 0.0
  %105 = vmatprep.subr.mxu0 0.0
  %106 = vmatpush1.msra.mxu0 0.0
  %107 = vmatprep.subr.mxu0 0.0
  %108 = vmatpush1.msra.mxu0 0.0
  %109 = vmatprep.subr.mxu0 0.0
  %110 = vmatpush1.msra.mxu0 0.0
  %111 = vmatprep.subr.mxu0 0.0
  %112 = vmatpush1.msra.mxu0 0.0
  %113 = vmatprep.subr.mxu0 0.0
  %114 = vmatpush1.msra.mxu0 0.0
  %115 = vmatprep.subr.mxu0 0.0
  %116 = vmatpush1.msra.mxu0 0.0
  %117 = vmatprep.subr.mxu0 0.0
  %118 = vmatpush1.msra.mxu0 0.0
  %119 = vmatprep.subr.mxu0 0.0
  %120 = vmatpush1.msra.mxu0 0.0
  %121 = vmatprep.mubr.f32.mxu0 0.0
  %122 = vmatmul.mubr.f32.gmra.mrb[0].mxu0 %v48
  %v123 = vpop.f32.mrb[0].mxu0
  %v124 = vadd.f32 0.0, %v123
  %v125 = vpop.f32.mrb[0].mxu0
  %126 = vmatprep.mubr.f32.mxu0 0.0
  %127 = vmatmul.mubr.f32.gmra.mrb[0].mxu0 %v51
  %v128 = vpop.f32.mrb[0].mxu0
  %v129 = vadd.f32 0.0, %v128
  %v130 = vpop.f32.mrb[0].mxu0
  %131 = vdwg.mxu0
  %v132 = vmul.f32 %v41, %v124
  %v133 = vmul.f32 %v42, %v129
  %v135 = vsel %vm32, %v29, 0
  %v138 = vsel %vm32, %v30, 0
  %140 = vmatprep.subr.mxu0 0.0
  %141 = vmatpush1.msra.mxu0 %v132
  %142 = vmatprep.subr.mxu0 0.0
  %143 = vmatpush1.msra.mxu0 %v133
  %144 = vmatprep.subr.mxu0 0.0
  %145 = vmatpush1.msra.mxu0 0.0
  %146 = vmatprep.subr.mxu0 0.0
  %147 = vmatpush1.msra.mxu0 0.0
  %148 = vmatprep.subr.mxu0 0.0
  %149 = vmatpush1.msra.mxu0 0.0
  %150 = vmatprep.subr.mxu0 0.0
  %151 = vmatpush1.msra.mxu0 0.0
  %152 = vmatprep.subr.mxu0 0.0
  %153 = vmatpush1.msra.mxu0 0.0
  %154 = vmatprep.subr.mxu0 0.0
  %155 = vmatpush1.msra.mxu0 0.0
  %156 = vmatprep.subr.mxu0 0.0
  %157 = vmatpush1.msra.mxu0 0.0
  %158 = vmatprep.subr.mxu0 0.0
  %159 = vmatpush1.msra.mxu0 0.0
  %160 = vmatprep.subr.mxu0 0.0
  %161 = vmatpush1.msra.mxu0 0.0
  %162 = vmatprep.subr.mxu0 0.0
  %163 = vmatpush1.msra.mxu0 0.0
  %164 = vmatprep.subr.mxu0 0.0
  %165 = vmatpush1.msra.mxu0 0.0
  %166 = vmatprep.subr.mxu0 0.0
  %167 = vmatpush1.msra.mxu0 0.0
  %168 = vmatprep.subr.mxu0 0.0
  %169 = vmatpush1.msra.mxu0 0.0
  %170 = vmatprep.subr.mxu0 0.0
  %171 = vmatpush1.msra.mxu0 0.0
  %172 = vmatprep.subr.mxu0 0.0
  %173 = vmatpush1.msra.mxu0 0.0
  %174 = vmatprep.subr.mxu0 0.0
  %175 = vmatpush1.msra.mxu0 0.0
  %176 = vmatprep.subr.mxu0 0.0
  %177 = vmatpush1.msra.mxu0 0.0
  %178 = vmatprep.subr.mxu0 0.0
  %179 = vmatpush1.msra.mxu0 0.0
  %180 = vmatprep.subr.mxu0 0.0
  %181 = vmatpush1.msra.mxu0 0.0
  %182 = vmatprep.subr.mxu0 0.0
  %183 = vmatpush1.msra.mxu0 0.0
  %184 = vmatprep.subr.mxu0 0.0
  %185 = vmatpush1.msra.mxu0 0.0
  %186 = vmatprep.subr.mxu0 0.0
  %187 = vmatpush1.msra.mxu0 0.0
  %188 = vmatprep.subr.mxu0 0.0
  %189 = vmatpush1.msra.mxu0 0.0
  %190 = vmatprep.subr.mxu0 0.0
  %191 = vmatpush1.msra.mxu0 0.0
  %192 = vmatprep.subr.mxu0 0.0
  %193 = vmatpush1.msra.mxu0 0.0
  %194 = vmatprep.subr.mxu0 0.0
  %195 = vmatpush1.msra.mxu0 0.0
  %196 = vmatprep.subr.mxu0 0.0
  %197 = vmatpush1.msra.mxu0 0.0
  %198 = vmatprep.subr.mxu0 0.0
  %199 = vmatpush1.msra.mxu0 0.0
  %200 = vmatprep.subr.mxu0 0.0
  %201 = vmatpush1.msra.mxu0 0.0
  %202 = vmatprep.subr.mxu0 0.0
  %203 = vmatpush1.msra.mxu0 0.0
  %204 = vmatprep.mubr.f32.mxu0 0.0
  %205 = vmatmul.mubr.f32.gmra.mrb[0].mxu0 %v135
  %v206 = vpop.f32.mrb[0].mxu0
  %v207 = vadd.f32 %v132, %v206
  %v208 = vpop.f32.mrb[0].mxu0
  %209 = vmatprep.mubr.f32.mxu0 0.0
  %210 = vmatmul.mubr.f32.gmra.mrb[0].mxu0 %v138
  %v211 = vpop.f32.mrb[0].mxu0
  %v212 = vadd.f32 %v133, %v211
  %v213 = vpop.f32.mrb[0].mxu0
  %214 = vdwg.mxu0
  %v215 = vmul.f32 %v41, %v207
  %v216 = vmul.f32 %v42, %v212
  %v217 = vlaneseq
  %v218 = vshrl.u32 %v217, 7
  %v219 = vsub.s32 0, %v218
  %v220 = vrot.slane %v31, %v219
  %v221 = vadd.f32 %v215, %v220
  %v222 = vadd.f32 %v216, %v220
  %v223 = vld [vmem:[%s3] sm:$0x1]
  %v224 = vmul.f32 %v223, %v223
  %vm225 = vcmask 57344
  %v226 = vsel %vm225, %v224, 0.0
  %227 = vadd.xlane.f32.xlu0 %v226
  %v228 = vpop.xlane.xlu0 %227
  %v229 = vrot.slane %v228, 4
  %v230 = vadd.f32 %v228, %v229
  %v231 = vrot.slane %v230, 2
  %v232 = vadd.f32 %v230, %v231
  %v233 = vrot.slane %v232, 1
  %v234 = vadd.f32 %v232, %v233
  %s235 = vtos %v234
  %v236 = vstv %s235
  %v237 = vrsqrt.pop %v236
  %s238 = vtos %v237
  %v240 = vlaneseq
  %v241 = vshrl.u32 %v240, 7
  %v242 = vsub.s32 0, %v241
  %v243 = vrot.slane %v223, %v242
  %v245 = vmul.f32 %v221, %v243
  %v246 = vmul.f32 %v222, %v243
  %vm247 = vcmask 64512
  %v248 = vsel %vm247, %v245, 0.0
  %249 = vadd.xlane.f32.xlu0 %v248
  %v250 = vpop.xlane.xlu0 %249
  %v251 = vsel %vm247, %v246, 0.0
  %252 = vadd.xlane.f32.xlu0 %v251
  %v253 = vpop.xlane.xlu0 %252
  %v254 = vstv %s238
  %v255 = vmul.f32 %v250, %v254
  %v256 = vmul.f32 %v253, %v254
  %v257 = vtanh.pop %v255
  %v258 = vtanh.pop %v256
  %259 = vxpose.xlu0.b32.start [1/16] %v257, 128
  %260 = vxpose.xlu0.b32.cont [2/16] %v258, 128
  %261 = vxpose.xlu0.b32.cont [3/16] 0.0, 128
  %262 = vxpose.xlu0.b32.cont [4/16] 0.0, 128
  %263 = vxpose.xlu0.b32.cont [5/16] 0.0, 128
  %264 = vxpose.xlu0.b32.cont [6/16] 0.0, 128
  %265 = vxpose.xlu0.b32.cont [7/16] 0.0, 128
  %266 = vxpose.xlu0.b32.cont [8/16] 0.0, 128
  %267 = vxpose.xlu0.b32.cont [9/16] 0.0, 128
  %268 = vxpose.xlu0.b32.cont [10/16] 0.0, 128
  %269 = vxpose.xlu0.b32.cont [11/16] 0.0, 128
  %270 = vxpose.xlu0.b32.cont [12/16] 0.0, 128
  %271 = vxpose.xlu0.b32.cont [13/16] 0.0, 128
  %272 = vxpose.xlu0.b32.cont [14/16] 0.0, 128
  %273 = vxpose.xlu0.b32.cont [15/16] 0.0, 128
  %274 = vxpose.xlu0.b32.end [16/16] 0.0, 128
  %v275 = vpop.trf.xlu0
  %v276 = vpop.trf.xlu0
  %v277 = vpop.trf.xlu0
  %v278 = vpop.trf.xlu0
  %v279 = vpop.trf.xlu0
  %v280 = vpop.trf.xlu0
  %v281 = vpop.trf.xlu0
  %v282 = vpop.trf.xlu0
  %v283 = vpop.trf.xlu0
  %v284 = vpop.trf.xlu0
  %v285 = vpop.trf.xlu0
  %v286 = vpop.trf.xlu0
  %v287 = vpop.trf.xlu0
  %v288 = vpop.trf.xlu0
  %v289 = vpop.trf.xlu0
  %v290 = vpop.trf.xlu0
  %v291 = vlaneseq
  %v292 = vshrl.u32 %v291, 7
  %v293 = vadd.s32 %v292, 8
  %v294 = vlaneseq
  %v295 = vand.u32 %v294, 127
  %v296 = vlaneseq
  %v297 = vshrl.u32 %v296, 7
  %v298 = vsub.s32 0, %v297
  %v299 = vrot.slane %v275, %v298
  %vm300 = vcmp.gt.f32.partialorder %v257, %v299
  %vm301 = vcmp.gt.f32.partialorder %v258, %v299
  %vm302 = vcmp.eq.f32.partialorder %v257, %v299
  %vm303 = vcmp.eq.f32.partialorder %v258, %v299
  %vm304 = vcmp.lt.s32.totalorder %v292, %v295
  %vm305 = vcmp.lt.s32.totalorder %v293, %v295
  %vm306 = vmand %vm302, %vm304
  %vm307 = vmand %vm303, %vm305
  %vm308 = vmor %vm300, %vm306
  %vm309 = vmor %vm301, %vm307
  %v310 = vsel %vm308, 1, 0
  %v311 = vsel %vm309, 1, 0
  %v312 = vcvt.s32.f32 %v310
  %v313 = vcvt.s32.f32 %v311
  %v314 = vsel %vm32, %v312, 0.0
  %v315 = vsel %vm32, %v313, 0.0
  %v316 = vadd.f32 %v314, %v315
  %v317 = vrot.slane %v316, 4
  %v318 = vadd.f32 %v316, %v317
  %v319 = vrot.slane %v318, 2
  %v320 = vadd.f32 %v318, %v319
  %v321 = vrot.slane %v320, 1
  %v322 = vadd.f32 %v320, %v321
  %v323 = vcvt.f32.s32.to.zero.pseudo %v322
  %vm324 = vcmp.eq.s32.totalorder %v292, %v323
  %v325 = vsel %vm324, 1, 0
  %v326 = vcvt.s32.f32 %v325
  %v328 = vsel %vm32, %v326, 0
  %330 = vmatprep.subr.mxu0 0.0
  %331 = vmatpush1.msra.mxu0 %v221
  %332 = vmatprep.subr.mxu0 0.0
  %333 = vmatpush1.msra.mxu0 %v222
  %334 = vmatprep.subr.mxu0 0.0
  %335 = vmatpush1.msra.mxu0 0.0
  %336 = vmatprep.subr.mxu0 0.0
  %337 = vmatpush1.msra.mxu0 0.0
  %338 = vmatprep.subr.mxu0 0.0
  %339 = vmatpush1.msra.mxu0 0.0
  %340 = vmatprep.subr.mxu0 0.0
  %341 = vmatpush1.msra.mxu0 0.0
  %342 = vmatprep.subr.mxu0 0.0
  %343 = vmatpush1.msra.mxu0 0.0
  %344 = vmatprep.subr.mxu0 0.0
  %345 = vmatpush1.msra.mxu0 0.0
  %346 = vmatprep.subr.mxu0 0.0
  %347 = vmatpush1.msra.mxu0 0.0
  %348 = vmatprep.subr.mxu0 0.0
  %349 = vmatpush1.msra.mxu0 0.0
  %350 = vmatprep.subr.mxu0 0.0
  %351 = vmatpush1.msra.mxu0 0.0
  %352 = vmatprep.subr.mxu0 0.0
  %353 = vmatpush1.msra.mxu0 0.0
  %354 = vmatprep.subr.mxu0 0.0
  %355 = vmatpush1.msra.mxu0 0.0
  %356 = vmatprep.subr.mxu0 0.0
  %357 = vmatpush1.msra.mxu0 0.0
  %358 = vmatprep.subr.mxu0 0.0
  %359 = vmatpush1.msra.mxu0 0.0
  %360 = vmatprep.subr.mxu0 0.0
  %361 = vmatpush1.msra.mxu0 0.0
  %362 = vmatprep.subr.mxu0 0.0
  %363 = vmatpush1.msra.mxu0 0.0
  %364 = vmatprep.subr.mxu0 0.0
  %365 = vmatpush1.msra.mxu0 0.0
  %366 = vmatprep.subr.mxu0 0.0
  %367 = vmatpush1.msra.mxu0 0.0
  %368 = vmatprep.subr.mxu0 0.0
  %369 = vmatpush1.msra.mxu0 0.0
  %370 = vmatprep.subr.mxu0 0.0
  %371 = vmatpush1.msra.mxu0 0.0
  %372 = vmatprep.subr.mxu0 0.0
  %373 = vmatpush1.msra.mxu0 0.0
  %374 = vmatprep.subr.mxu0 0.0
  %375 = vmatpush1.msra.mxu0 0.0
  %376 = vmatprep.subr.mxu0 0.0
  %377 = vmatpush1.msra.mxu0 0.0
  %378 = vmatprep.subr.mxu0 0.0
  %379 = vmatpush1.msra.mxu0 0.0
  %380 = vmatprep.subr.mxu0 0.0
  %381 = vmatpush1.msra.mxu0 0.0
  %382 = vmatprep.subr.mxu0 0.0
  %383 = vmatpush1.msra.mxu0 0.0
  %384 = vmatprep.subr.mxu0 0.0
  %385 = vmatpush1.msra.mxu0 0.0
  %386 = vmatprep.subr.mxu0 0.0
  %387 = vmatpush1.msra.mxu0 0.0
  %388 = vmatprep.subr.mxu0 0.0
  %389 = vmatpush1.msra.mxu0 0.0
  %390 = vmatprep.subr.mxu0 0.0
  %391 = vmatpush1.msra.mxu0 0.0
  %392 = vmatprep.subr.mxu0 0.0
  %393 = vmatpush1.msra.mxu0 0.0
  %394 = vmatprep.mubr.f32.mxu0 0.0
  %395 = vmatmul.mubr.f32.gmra.mrb[0].mxu0 %v328
  %v396 = vpop.f32.mrb[0].mxu0
  %v397 = vadd.f32 0.0, %v396
  %v398 = vpop.f32.mrb[0].mxu0
  %399 = vdwg.mxu0
  %400 = vmatprep.subr.mxu0 0.0
  %401 = vmatpush1.msra.mxu0 %v257
  %402 = vmatprep.subr.mxu0 0.0
  %403 = vmatpush1.msra.mxu0 %v258
  %404 = vmatprep.subr.mxu0 0.0
  %405 = vmatpush1.msra.mxu0 0.0
  %406 = vmatprep.subr.mxu0 0.0
  %407 = vmatpush1.msra.mxu0 0.0
  %408 = vmatprep.subr.mxu0 0.0
  %409 = vmatpush1.msra.mxu0 0.0
  %410 = vmatprep.subr.mxu0 0.0
  %411 = vmatpush1.msra.mxu0 0.0
  %412 = vmatprep.subr.mxu0 0.0
  %413 = vmatpush1.msra.mxu0 0.0
  %414 = vmatprep.subr.mxu0 0.0
  %415 = vmatpush1.msra.mxu0 0.0
  %416 = vmatprep.subr.mxu0 0.0
  %417 = vmatpush1.msra.mxu0 0.0
  %418 = vmatprep.subr.mxu0 0.0
  %419 = vmatpush1.msra.mxu0 0.0
  %420 = vmatprep.subr.mxu0 0.0
  %421 = vmatpush1.msra.mxu0 0.0
  %422 = vmatprep.subr.mxu0 0.0
  %423 = vmatpush1.msra.mxu0 0.0
  %424 = vmatprep.subr.mxu0 0.0
  %425 = vmatpush1.msra.mxu0 0.0
  %426 = vmatprep.subr.mxu0 0.0
  %427 = vmatpush1.msra.mxu0 0.0
  %428 = vmatprep.subr.mxu0 0.0
  %429 = vmatpush1.msra.mxu0 0.0
  %430 = vmatprep.subr.mxu0 0.0
  %431 = vmatpush1.msra.mxu0 0.0
  %432 = vmatprep.subr.mxu0 0.0
  %433 = vmatpush1.msra.mxu0 0.0
  %434 = vmatprep.subr.mxu0 0.0
  %435 = vmatpush1.msra.mxu0 0.0
  %436 = vmatprep.subr.mxu0 0.0
  %437 = vmatpush1.msra.mxu0 0.0
  %438 = vmatprep.subr.mxu0 0.0
  %439 = vmatpush1.msra.mxu0 0.0
  %440 = vmatprep.subr.mxu0 0.0
  %441 = vmatpush1.msra.mxu0 0.0
  %442 = vmatprep.subr.mxu0 0.0
  %443 = vmatpush1.msra.mxu0 0.0
  %444 = vmatprep.subr.mxu0 0.0
  %445 = vmatpush1.msra.mxu0 0.0
  %446 = vmatprep.subr.mxu0 0.0
  %447 = vmatpush1.msra.mxu0 0.0
  %448 = vmatprep.subr.mxu0 0.0
  %449 = vmatpush1.msra.mxu0 0.0
  %450 = vmatprep.subr.mxu0 0.0
  %451 = vmatpush1.msra.mxu0 0.0
  %452 = vmatprep.subr.mxu0 0.0
  %453 = vmatpush1.msra.mxu0 0.0
  %454 = vmatprep.subr.mxu0 0.0
  %455 = vmatpush1.msra.mxu0 0.0
  %456 = vmatprep.subr.mxu0 0.0
  %457 = vmatpush1.msra.mxu0 0.0
  %458 = vmatprep.subr.mxu0 0.0
  %459 = vmatpush1.msra.mxu0 0.0
  %460 = vmatprep.subr.mxu0 0.0
  %461 = vmatpush1.msra.mxu0 0.0
  %462 = vmatprep.subr.mxu0 0.0
  %463 = vmatpush1.msra.mxu0 0.0
  %464 = vmatprep.mubr.f32.mxu0 0.0
  %465 = vmatmul.mubr.f32.gmra.mrb[0].mxu0 %v328
  %v466 = vpop.f32.mrb[0].mxu0
  %v467 = vadd.f32 0.0, %v466
  %v468 = vpop.f32.mrb[0].mxu0
  %469 = vdwg.mxu0
  %471 = vset.pattern.permute.xlu0 0
  %472 = vperm.xlu0 %471, %v467
  %v473 = vpop.permute.xlu0 %472
  %v475 = vmul.f32 %v397, %v473
  %476 = vmatprep.subr.mxu0 0.0
  %477 = vmatpush1.msra.mxu0 %v29
  %478 = vmatprep.subr.mxu0 0.0
  %479 = vmatpush1.msra.mxu0 %v30
  %480 = vmatprep.subr.mxu0 0.0
  %481 = vmatpush1.msra.mxu0 0.0
  %482 = vmatprep.subr.mxu0 0.0
  %483 = vmatpush1.msra.mxu0 0.0
  %484 = vmatprep.subr.mxu0 0.0
  %485 = vmatpush1.msra.mxu0 0.0
  %486 = vmatprep.subr.mxu0 0.0
  %487 = vmatpush1.msra.mxu0 0.0
  %488 = vmatprep.subr.mxu0 0.0
  %489 = vmatpush1.msra.mxu0 0.0
  %490 = vmatprep.subr.mxu0 0.0
  %491 = vmatpush1.msra.mxu0 0.0
  %492 = vmatprep.subr.mxu0 0.0
  %493 = vmatpush1.msra.mxu0 0.0
  %494 = vmatprep.subr.mxu0 0.0
  %495 = vmatpush1.msra.mxu0 0.0
  %496 = vmatprep.subr.mxu0 0.0
  %497 = vmatpush1.msra.mxu0 0.0
  %498 = vmatprep.subr.mxu0 0.0
  %499 = vmatpush1.msra.mxu0 0.0
  %500 = vmatprep.subr.mxu0 0.0
  %501 = vmatpush1.msra.mxu0 0.0
  %502 = vmatprep.subr.mxu0 0.0
  %503 = vmatpush1.msra.mxu0 0.0
  %504 = vmatprep.subr.mxu0 0.0
  %505 = vmatpush1.msra.mxu0 0.0
  %506 = vmatprep.subr.mxu0 0.0
  %507 = vmatpush1.msra.mxu0 0.0
  %508 = vmatprep.subr.mxu0 0.0
  %509 = vmatpush1.msra.mxu0 0.0
  %510 = vmatprep.subr.mxu0 0.0
  %511 = vmatpush1.msra.mxu0 0.0
  %512 = vmatprep.subr.mxu0 0.0
  %513 = vmatpush1.msra.mxu0 0.0
  %514 = vmatprep.subr.mxu0 0.0
  %515 = vmatpush1.msra.mxu0 0.0
  %516 = vmatprep.subr.mxu0 0.0
  %517 = vmatpush1.msra.mxu0 0.0
  %518 = vmatprep.subr.mxu0 0.0
  %519 = vmatpush1.msra.mxu0 0.0
  %520 = vmatprep.subr.mxu0 0.0
  %521 = vmatpush1.msra.mxu0 0.0
  %522 = vmatprep.subr.mxu0 0.0
  %523 = vmatpush1.msra.mxu0 0.0
  %524 = vmatprep.subr.mxu0 0.0
  %525 = vmatpush1.msra.mxu0 0.0
  %526 = vmatprep.subr.mxu0 0.0
  %527 = vmatpush1.msra.mxu0 0.0
  %528 = vmatprep.subr.mxu0 0.0
  %529 = vmatpush1.msra.mxu0 0.0
  %530 = vmatprep.subr.mxu0 0.0
  %531 = vmatpush1.msra.mxu0 0.0
  %532 = vmatprep.subr.mxu0 0.0
  %533 = vmatpush1.msra.mxu0 0.0
  %534 = vmatprep.subr.mxu0 0.0
  %535 = vmatpush1.msra.mxu0 0.0
  %536 = vmatprep.subr.mxu0 0.0
  %537 = vmatpush1.msra.mxu0 0.0
  %538 = vmatprep.subr.mxu0 0.0
  %539 = vmatpush1.msra.mxu0 0.0
  %540 = vmatprep.mubr.f32.mxu0 0.0
  %541 = vmatmul.mubr.f32.gmra.mrb[0].mxu0 %v328
  %v542 = vpop.f32.mrb[0].mxu0
  %v543 = vadd.f32 0.0, %v542
  %v544 = vpop.f32.mrb[0].mxu0
  %545 = vdwg.mxu0
  %v547 = vsel %vm32, %v543, 0
  %549 = vmatprep.subr.mxu0 0.0
  %550 = vmatpush1.xpose.msra.mxu0 %v328
  %551 = vmatprep.subr.mxu0 0.0
  %552 = vmatpush1.xpose.msra.mxu0 0.0
  %553 = vmatprep.subr.mxu0 0.0
  %554 = vmatpush1.xpose.msra.mxu0 0.0
  %555 = vmatprep.subr.mxu0 0.0
  %556 = vmatpush1.xpose.msra.mxu0 0.0
  %557 = vmatprep.subr.mxu0 0.0
  %558 = vmatpush1.xpose.msra.mxu0 0.0
  %559 = vmatprep.subr.mxu0 0.0
  %560 = vmatpush1.xpose.msra.mxu0 0.0
  %561 = vmatprep.subr.mxu0 0.0
  %562 = vmatpush1.xpose.msra.mxu0 0.0
  %563 = vmatprep.subr.mxu0 0.0
  %564 = vmatpush1.xpose.msra.mxu0 0.0
  %565 = vmatprep.subr.mxu0 0.0
  %566 = vmatpush1.xpose.msra.mxu0 0.0
  %567 = vmatprep.subr.mxu0 0.0
  %568 = vmatpush1.xpose.msra.mxu0 0.0
  %569 = vmatprep.subr.mxu0 0.0
  %570 = vmatpush1.xpose.msra.mxu0 0.0
  %571 = vmatprep.subr.mxu0 0.0
  %572 = vmatpush1.xpose.msra.mxu0 0.0
  %573 = vmatprep.subr.mxu0 0.0
  %574 = vmatpush1.xpose.msra.mxu0 0.0
  %575 = vmatprep.subr.mxu0 0.0
  %576 = vmatpush1.xpose.msra.mxu0 0.0
  %577 = vmatprep.subr.mxu0 0.0
  %578 = vmatpush1.xpose.msra.mxu0 0.0
  %579 = vmatprep.subr.mxu0 0.0
  %580 = vmatpush1.xpose.msra.mxu0 0.0
  %581 = vmatprep.subr.mxu0 0.0
  %582 = vmatpush1.xpose.msra.mxu0 0.0
  %583 = vmatprep.subr.mxu0 0.0
  %584 = vmatpush1.xpose.msra.mxu0 0.0
  %585 = vmatprep.subr.mxu0 0.0
  %586 = vmatpush1.xpose.msra.mxu0 0.0
  %587 = vmatprep.subr.mxu0 0.0
  %588 = vmatpush1.xpose.msra.mxu0 0.0
  %589 = vmatprep.subr.mxu0 0.0
  %590 = vmatpush1.xpose.msra.mxu0 0.0
  %591 = vmatprep.subr.mxu0 0.0
  %592 = vmatpush1.xpose.msra.mxu0 0.0
  %593 = vmatprep.subr.mxu0 0.0
  %594 = vmatpush1.xpose.msra.mxu0 0.0
  %595 = vmatprep.subr.mxu0 0.0
  %596 = vmatpush1.xpose.msra.mxu0 0.0
  %597 = vmatprep.subr.mxu0 0.0
  %598 = vmatpush1.xpose.msra.mxu0 0.0
  %599 = vmatprep.subr.mxu0 0.0
  %600 = vmatpush1.xpose.msra.mxu0 0.0
  %601 = vmatprep.subr.mxu0 0.0
  %602 = vmatpush1.xpose.msra.mxu0 0.0
  %603 = vmatprep.subr.mxu0 0.0
  %604 = vmatpush1.xpose.msra.mxu0 0.0
  %605 = vmatprep.subr.mxu0 0.0
  %606 = vmatpush1.xpose.msra.mxu0 0.0
  %607 = vmatprep.subr.mxu0 0.0
  %608 = vmatpush1.xpose.msra.mxu0 0.0
  %609 = vmatprep.subr.mxu0 0.0
  %610 = vmatpush1.xpose.msra.mxu0 0.0
  %611 = vmatprep.subr.mxu0 0.0
  %612 = vmatpush1.xpose.msra.mxu0 0.0
  %613 = vmatprep.mubr.f32.mxu0 0.0
  %614 = vmatmul.mubr.f32.gmra.mrb[0].mxu0 %v547
  %v615 = vpop.f32.mrb[0].mxu0
  %v616 = vadd.f32 0.0, %v615
  %v617 = vpop.f32.mrb[0].mxu0
  %618 = vdwg.mxu0
  %v619 = vsel %vm247, %v616, 0.0
  %620 = vadd.xlane.f32.xlu0 %v619
  %v621 = vpop.xlane.xlu0 %620
  %v622 = vadd.f32 %v621, 1.0
  %v623 = vrsqrt.pop %v622
  %v624 = vld [vmem:[%s4] sm:$0xff]
  %v626 = vsel %vm247, %v475, 0
  %628 = vmatprep.subr.mxu0 0.0
  %629 = vmatpush1.msra.mxu0 %v624
  %630 = vmatprep.subr.mxu0 0.0
  %631 = vmatpush1.msra.mxu0 0.0
  %632 = vmatprep.subr.mxu0 0.0
  %633 = vmatpush1.msra.mxu0 0.0
  %634 = vmatprep.subr.mxu0 0.0
  %635 = vmatpush1.msra.mxu0 0.0
  %636 = vmatprep.subr.mxu0 0.0
  %637 = vmatpush1.msra.mxu0 0.0
  %638 = vmatprep.subr.mxu0 0.0
  %639 = vmatpush1.msra.mxu0 0.0
  %640 = vmatprep.subr.mxu0 0.0
  %641 = vmatpush1.msra.mxu0 0.0
  %642 = vmatprep.subr.mxu0 0.0
  %643 = vmatpush1.msra.mxu0 0.0
  %644 = vmatprep.subr.mxu0 0.0
  %645 = vmatpush1.msra.mxu0 0.0
  %646 = vmatprep.subr.mxu0 0.0
  %647 = vmatpush1.msra.mxu0 0.0
  %648 = vmatprep.subr.mxu0 0.0
  %649 = vmatpush1.msra.mxu0 0.0
  %650 = vmatprep.subr.mxu0 0.0
  %651 = vmatpush1.msra.mxu0 0.0
  %652 = vmatprep.subr.mxu0 0.0
  %653 = vmatpush1.msra.mxu0 0.0
  %654 = vmatprep.subr.mxu0 0.0
  %655 = vmatpush1.msra.mxu0 0.0
  %656 = vmatprep.subr.mxu0 0.0
  %657 = vmatpush1.msra.mxu0 0.0
  %658 = vmatprep.subr.mxu0 0.0
  %659 = vmatpush1.msra.mxu0 0.0
  %660 = vmatprep.subr.mxu0 0.0
  %661 = vmatpush1.msra.mxu0 0.0
  %662 = vmatprep.subr.mxu0 0.0
  %663 = vmatpush1.msra.mxu0 0.0
  %664 = vmatprep.subr.mxu0 0.0
  %665 = vmatpush1.msra.mxu0 0.0
  %666 = vmatprep.subr.mxu0 0.0
  %667 = vmatpush1.msra.mxu0 0.0
  %668 = vmatprep.subr.mxu0 0.0
  %669 = vmatpush1.msra.mxu0 0.0
  %670 = vmatprep.subr.mxu0 0.0
  %671 = vmatpush1.msra.mxu0 0.0
  %672 = vmatprep.subr.mxu0 0.0
  %673 = vmatpush1.msra.mxu0 0.0
  %674 = vmatprep.subr.mxu0 0.0
  %675 = vmatpush1.msra.mxu0 0.0
  %676 = vmatprep.subr.mxu0 0.0
  %677 = vmatpush1.msra.mxu0 0.0
  %678 = vmatprep.subr.mxu0 0.0
  %679 = vmatpush1.msra.mxu0 0.0
  %680 = vmatprep.subr.mxu0 0.0
  %681 = vmatpush1.msra.mxu0 0.0
  %682 = vmatprep.subr.mxu0 0.0
  %683 = vmatpush1.msra.mxu0 0.0
  %684 = vmatprep.subr.mxu0 0.0
  %685 = vmatpush1.msra.mxu0 0.0
  %686 = vmatprep.subr.mxu0 0.0
  %687 = vmatpush1.msra.mxu0 0.0
  %688 = vmatprep.subr.mxu0 0.0
  %689 = vmatpush1.msra.mxu0 0.0
  %690 = vmatprep.subr.mxu0 0.0
  %691 = vmatpush1.msra.mxu0 0.0
  %692 = vmatprep.mubr.f32.mxu0 0.0
  %693 = vmatmul.mubr.f32.gmra.mrb[0].mxu0 %v626
  %v694 = vpop.f32.mrb[0].mxu0
  %v695 = vadd.f32 0.0, %v694
  %v696 = vpop.f32.mrb[0].mxu0
  %697 = vdwg.mxu0
  %v698 = vmul.f32 %v623, %v695
  %v700 = vsel %vm247, %v616, 0
  %702 = vmatprep.subr.mxu0 0.0
  %703 = vmatpush1.msra.mxu0 %v698
  %704 = vmatprep.subr.mxu0 0.0
  %705 = vmatpush1.msra.mxu0 0.0
  %706 = vmatprep.subr.mxu0 0.0
  %707 = vmatpush1.msra.mxu0 0.0
  %708 = vmatprep.subr.mxu0 0.0
  %709 = vmatpush1.msra.mxu0 0.0
  %710 = vmatprep.subr.mxu0 0.0
  %711 = vmatpush1.msra.mxu0 0.0
  %712 = vmatprep.subr.mxu0 0.0
  %713 = vmatpush1.msra.mxu0 0.0
  %714 = vmatprep.subr.mxu0 0.0
  %715 = vmatpush1.msra.mxu0 0.0
  %716 = vmatprep.subr.mxu0 0.0
  %717 = vmatpush1.msra.mxu0 0.0
  %718 = vmatprep.subr.mxu0 0.0
  %719 = vmatpush1.msra.mxu0 0.0
  %720 = vmatprep.subr.mxu0 0.0
  %721 = vmatpush1.msra.mxu0 0.0
  %722 = vmatprep.subr.mxu0 0.0
  %723 = vmatpush1.msra.mxu0 0.0
  %724 = vmatprep.subr.mxu0 0.0
  %725 = vmatpush1.msra.mxu0 0.0
  %726 = vmatprep.subr.mxu0 0.0
  %727 = vmatpush1.msra.mxu0 0.0
  %728 = vmatprep.subr.mxu0 0.0
  %729 = vmatpush1.msra.mxu0 0.0
  %730 = vmatprep.subr.mxu0 0.0
  %731 = vmatpush1.msra.mxu0 0.0
  %732 = vmatprep.subr.mxu0 0.0
  %733 = vmatpush1.msra.mxu0 0.0
  %734 = vmatprep.subr.mxu0 0.0
  %735 = vmatpush1.msra.mxu0 0.0
  %736 = vmatprep.subr.mxu0 0.0
  %737 = vmatpush1.msra.mxu0 0.0
  %738 = vmatprep.subr.mxu0 0.0
  %739 = vmatpush1.msra.mxu0 0.0
  %740 = vmatprep.subr.mxu0 0.0
  %741 = vmatpush1.msra.mxu0 0.0
  %742 = vmatprep.subr.mxu0 0.0
  %743 = vmatpush1.msra.mxu0 0.0
  %744 = vmatprep.subr.mxu0 0.0
  %745 = vmatpush1.msra.mxu0 0.0
  %746 = vmatprep.subr.mxu0 0.0
  %747 = vmatpush1.msra.mxu0 0.0
  %748 = vmatprep.subr.mxu0 0.0
  %749 = vmatpush1.msra.mxu0 0.0
  %750 = vmatprep.subr.mxu0 0.0
  %751 = vmatpush1.msra.mxu0 0.0
  %752 = vmatprep.subr.mxu0 0.0
  %753 = vmatpush1.msra.mxu0 0.0
  %754 = vmatprep.subr.mxu0 0.0
  %755 = vmatpush1.msra.mxu0 0.0
  %756 = vmatprep.subr.mxu0 0.0
  %757 = vmatpush1.msra.mxu0 0.0
  %758 = vmatprep.subr.mxu0 0.0
  %759 = vmatpush1.msra.mxu0 0.0
  %760 = vmatprep.subr.mxu0 0.0
  %761 = vmatpush1.msra.mxu0 0.0
  %762 = vmatprep.subr.mxu0 0.0
  %763 = vmatpush1.msra.mxu0 0.0
  %764 = vmatprep.subr.mxu0 0.0
  %765 = vmatpush1.msra.mxu0 0.0
  %766 = vmatprep.mubr.f32.mxu0 0.0
  %767 = vmatmul.mubr.f32.gmra.mrb[0].mxu0 %v700
  %v768 = vpop.f32.mrb[0].mxu0
  %v769 = vadd.f32 %v698, %v768
  %v770 = vpop.f32.mrb[0].mxu0
  %771 = vdwg.mxu0
  %v772 = vmul.f32 %v623, %v769
  %v773 = vlaneseq
  %v774 = vshrl.u32 %v773, 7
  %v775 = vsub.s32 1, %v774
  %v776 = vrot.slane %v31, %v775
  %v777 = vadd.f32 %v772, %v776
  %v778 = vld [vmem:[%s5] sm:$0xff]
  %v779 = vld [vmem:[%s5 + $0x8] sm:$0xff]
  %v780 = vld [vmem:[%s5 + $0x10] sm:$0xff]
  %v782 = vsel %vm247, %v397, 0
  %784 = vmatprep.subr.mxu0 0.0
  %785 = vmatpush1.msra.mxu0 %v780
  %786 = vmatprep.subr.mxu0 0.0
  %787 = vmatpush1.msra.mxu0 0.0
  %788 = vmatprep.subr.mxu0 0.0
  %789 = vmatpush1.msra.mxu0 0.0
  %790 = vmatprep.subr.mxu0 0.0
  %791 = vmatpush1.msra.mxu0 0.0
  %792 = vmatprep.subr.mxu0 0.0
  %793 = vmatpush1.msra.mxu0 0.0
  %794 = vmatprep.subr.mxu0 0.0
  %795 = vmatpush1.msra.mxu0 0.0
  %796 = vmatprep.subr.mxu0 0.0
  %797 = vmatpush1.msra.mxu0 0.0
  %798 = vmatprep.subr.mxu0 0.0
  %799 = vmatpush1.msra.mxu0 0.0
  %800 = vmatprep.subr.mxu0 0.0
  %801 = vmatpush1.msra.mxu0 0.0
  %802 = vmatprep.subr.mxu0 0.0
  %803 = vmatpush1.msra.mxu0 0.0
  %804 = vmatprep.subr.mxu0 0.0
  %805 = vmatpush1.msra.mxu0 0.0
  %806 = vmatprep.subr.mxu0 0.0
  %807 = vmatpush1.msra.mxu0 0.0
  %808 = vmatprep.subr.mxu0 0.0
  %809 = vmatpush1.msra.mxu0 0.0
  %810 = vmatprep.subr.mxu0 0.0
  %811 = vmatpush1.msra.mxu0 0.0
  %812 = vmatprep.subr.mxu0 0.0
  %813 = vmatpush1.msra.mxu0 0.0
  %814 = vmatprep.subr.mxu0 0.0
  %815 = vmatpush1.msra.mxu0 0.0
  %816 = vmatprep.subr.mxu0 0.0
  %817 = vmatpush1.msra.mxu0 0.0
  %818 = vmatprep.subr.mxu0 0.0
  %819 = vmatpush1.msra.mxu0 0.0
  %820 = vmatprep.subr.mxu0 0.0
  %821 = vmatpush1.msra.mxu0 0.0
  %822 = vmatprep.subr.mxu0 0.0
  %823 = vmatpush1.msra.mxu0 0.0
  %824 = vmatprep.subr.mxu0 0.0
  %825 = vmatpush1.msra.mxu0 0.0
  %826 = vmatprep.subr.mxu0 0.0
  %827 = vmatpush1.msra.mxu0 0.0
  %828 = vmatprep.subr.mxu0 0.0
  %829 = vmatpush1.msra.mxu0 0.0
  %830 = vmatprep.subr.mxu0 0.0
  %831 = vmatpush1.msra.mxu0 0.0
  %832 = vmatprep.subr.mxu0 0.0
  %833 = vmatpush1.msra.mxu0 0.0
  %834 = vmatprep.subr.mxu0 0.0
  %835 = vmatpush1.msra.mxu0 0.0
  %836 = vmatprep.subr.mxu0 0.0
  %837 = vmatpush1.msra.mxu0 0.0
  %838 = vmatprep.subr.mxu0 0.0
  %839 = vmatpush1.msra.mxu0 0.0
  %840 = vmatprep.subr.mxu0 0.0
  %841 = vmatpush1.msra.mxu0 0.0
  %842 = vmatprep.subr.mxu0 0.0
  %843 = vmatpush1.msra.mxu0 0.0
  %844 = vmatprep.subr.mxu0 0.0
  %845 = vmatpush1.msra.mxu0 0.0
  %846 = vmatprep.subr.mxu0 0.0
  %847 = vmatpush1.msra.mxu0 0.0
  %848 = vmatprep.mubr.f32.mxu0 0.0
  %849 = vmatmul.mubr.f32.gmra.mrb[0].mxu0 %v782
  %v850 = vpop.f32.mrb[0].mxu0
  %v851 = vadd.f32 0.0, %v850
  %v852 = vpop.f32.mrb[0].mxu0
  %853 = vdwg.mxu0
  %v855 = vsel %vm32, %v777, 0
  %857 = vmatprep.subr.mxu0 0.0
  %858 = vmatpush1.msra.mxu0 %v778
  %859 = vmatprep.subr.mxu0 0.0
  %860 = vmatpush1.msra.mxu0 %v779
  %861 = vmatprep.subr.mxu0 0.0
  %862 = vmatpush1.msra.mxu0 0.0
  %863 = vmatprep.subr.mxu0 0.0
  %864 = vmatpush1.msra.mxu0 0.0
  %865 = vmatprep.subr.mxu0 0.0
  %866 = vmatpush1.msra.mxu0 0.0
  %867 = vmatprep.subr.mxu0 0.0
  %868 = vmatpush1.msra.mxu0 0.0
  %869 = vmatprep.subr.mxu0 0.0
  %870 = vmatpush1.msra.mxu0 0.0
  %871 = vmatprep.subr.mxu0 0.0
  %872 = vmatpush1.msra.mxu0 0.0
  %873 = vmatprep.subr.mxu0 0.0
  %874 = vmatpush1.msra.mxu0 0.0
  %875 = vmatprep.subr.mxu0 0.0
  %876 = vmatpush1.msra.mxu0 0.0
  %877 = vmatprep.subr.mxu0 0.0
  %878 = vmatpush1.msra.mxu0 0.0
  %879 = vmatprep.subr.mxu0 0.0
  %880 = vmatpush1.msra.mxu0 0.0
  %881 = vmatprep.subr.mxu0 0.0
  %882 = vmatpush1.msra.mxu0 0.0
  %883 = vmatprep.subr.mxu0 0.0
  %884 = vmatpush1.msra.mxu0 0.0
  %885 = vmatprep.subr.mxu0 0.0
  %886 = vmatpush1.msra.mxu0 0.0
  %887 = vmatprep.subr.mxu0 0.0
  %888 = vmatpush1.msra.mxu0 0.0
  %889 = vmatprep.subr.mxu0 0.0
  %890 = vmatpush1.msra.mxu0 0.0
  %891 = vmatprep.subr.mxu0 0.0
  %892 = vmatpush1.msra.mxu0 0.0
  %893 = vmatprep.subr.mxu0 0.0
  %894 = vmatpush1.msra.mxu0 0.0
  %895 = vmatprep.subr.mxu0 0.0
  %896 = vmatpush1.msra.mxu0 0.0
  %897 = vmatprep.subr.mxu0 0.0
  %898 = vmatpush1.msra.mxu0 0.0
  %899 = vmatprep.subr.mxu0 0.0
  %900 = vmatpush1.msra.mxu0 0.0
  %901 = vmatprep.subr.mxu0 0.0
  %902 = vmatpush1.msra.mxu0 0.0
  %903 = vmatprep.subr.mxu0 0.0
  %904 = vmatpush1.msra.mxu0 0.0
  %905 = vmatprep.subr.mxu0 0.0
  %906 = vmatpush1.msra.mxu0 0.0
  %907 = vmatprep.subr.mxu0 0.0
  %908 = vmatpush1.msra.mxu0 0.0
  %909 = vmatprep.subr.mxu0 0.0
  %910 = vmatpush1.msra.mxu0 0.0
  %911 = vmatprep.subr.mxu0 0.0
  %912 = vmatpush1.msra.mxu0 0.0
  %913 = vmatprep.subr.mxu0 0.0
  %914 = vmatpush1.msra.mxu0 0.0
  %915 = vmatprep.subr.mxu0 0.0
  %916 = vmatpush1.msra.mxu0 0.0
  %917 = vmatprep.subr.mxu0 0.0
  %918 = vmatpush1.msra.mxu0 0.0
  %919 = vmatprep.subr.mxu0 0.0
  %920 = vmatpush1.msra.mxu0 0.0
  %921 = vmatprep.mubr.f32.mxu0 0.0
  %922 = vmatmul.mubr.f32.gmra.mrb[0].mxu0 %v855
  %v923 = vpop.f32.mrb[0].mxu0
  %v924 = vadd.f32 %v851, %v923
  %v925 = vpop.f32.mrb[0].mxu0
  %926 = vdwg.mxu0
  %v927 = vmul.f32 %v623, %v924
  %928 = vmatprep.subr.mxu0 0.0
  %929 = vmatpush1.msra.mxu0 %v927
  %930 = vmatprep.subr.mxu0 0.0
  %931 = vmatpush1.msra.mxu0 0.0
  %932 = vmatprep.subr.mxu0 0.0
  %933 = vmatpush1.msra.mxu0 0.0
  %934 = vmatprep.subr.mxu0 0.0
  %935 = vmatpush1.msra.mxu0 0.0
  %936 = vmatprep.subr.mxu0 0.0
  %937 = vmatpush1.msra.mxu0 0.0
  %938 = vmatprep.subr.mxu0 0.0
  %939 = vmatpush1.msra.mxu0 0.0
  %940 = vmatprep.subr.mxu0 0.0
  %941 = vmatpush1.msra.mxu0 0.0
  %942 = vmatprep.subr.mxu0 0.0
  %943 = vmatpush1.msra.mxu0 0.0
  %944 = vmatprep.subr.mxu0 0.0
  %945 = vmatpush1.msra.mxu0 0.0
  %946 = vmatprep.subr.mxu0 0.0
  %947 = vmatpush1.msra.mxu0 0.0
  %948 = vmatprep.subr.mxu0 0.0
  %949 = vmatpush1.msra.mxu0 0.0
  %950 = vmatprep.subr.mxu0 0.0
  %951 = vmatpush1.msra.mxu0 0.0
  %952 = vmatprep.subr.mxu0 0.0
  %953 = vmatpush1.msra.mxu0 0.0
  %954 = vmatprep.subr.mxu0 0.0
  %955 = vmatpush1.msra.mxu0 0.0
  %956 = vmatprep.subr.mxu0 0.0
  %957 = vmatpush1.msra.mxu0 0.0
  %958 = vmatprep.subr.mxu0 0.0
  %959 = vmatpush1.msra.mxu0 0.0
  %960 = vmatprep.subr.mxu0 0.0
  %961 = vmatpush1.msra.mxu0 0.0
  %962 = vmatprep.subr.mxu0 0.0
  %963 = vmatpush1.msra.mxu0 0.0
  %964 = vmatprep.subr.mxu0 0.0
  %965 = vmatpush1.msra.mxu0 0.0
  %966 = vmatprep.subr.mxu0 0.0
  %967 = vmatpush1.msra.mxu0 0.0
  %968 = vmatprep.subr.mxu0 0.0
  %969 = vmatpush1.msra.mxu0 0.0
  %970 = vmatprep.subr.mxu0 0.0
  %971 = vmatpush1.msra.mxu0 0.0
  %972 = vmatprep.subr.mxu0 0.0
  %973 = vmatpush1.msra.mxu0 0.0
  %974 = vmatprep.subr.mxu0 0.0
  %975 = vmatpush1.msra.mxu0 0.0
  %976 = vmatprep.subr.mxu0 0.0
  %977 = vmatpush1.msra.mxu0 0.0
  %978 = vmatprep.subr.mxu0 0.0
  %979 = vmatpush1.msra.mxu0 0.0
  %980 = vmatprep.subr.mxu0 0.0
  %981 = vmatpush1.msra.mxu0 0.0
  %982 = vmatprep.subr.mxu0 0.0
  %983 = vmatpush1.msra.mxu0 0.0
  %984 = vmatprep.subr.mxu0 0.0
  %985 = vmatpush1.msra.mxu0 0.0
  %986 = vmatprep.subr.mxu0 0.0
  %987 = vmatpush1.msra.mxu0 0.0
  %988 = vmatprep.subr.mxu0 0.0
  %989 = vmatpush1.msra.mxu0 0.0
  %990 = vmatprep.subr.mxu0 0.0
  %991 = vmatpush1.msra.mxu0 0.0
  %992 = vmatprep.mubr.f32.mxu0 0.0
  %993 = vmatmul.mubr.f32.gmra.mrb[0].mxu0 %v700
  %v994 = vpop.f32.mrb[0].mxu0
  %v995 = vadd.f32 %v927, %v994
  %v996 = vpop.f32.mrb[0].mxu0
  %997 = vdwg.mxu0
  %v998 = vmul.f32 %v623, %v995
  %v999 = vlaneseq
  %v1000 = vshrl.u32 %v999, 7
  %v1001 = vsub.s32 2, %v1000
  %v1002 = vrot.slane %v31, %v1001
  %v1003 = vadd.f32 %v998, %v1002
  %v1004 = vld [vmem:[%s6] sm:$0xff]
  %v1006 = vsel %vm247, %v1003, 0
  %1008 = vmatprep.subr.mxu0 0.0
  %1009 = vmatpush1.msra.mxu0 %v1004
  %1010 = vmatprep.subr.mxu0 0.0
  %1011 = vmatpush1.msra.mxu0 0.0
  %1012 = vmatprep.subr.mxu0 0.0
  %1013 = vmatpush1.msra.mxu0 0.0
  %1014 = vmatprep.subr.mxu0 0.0
  %1015 = vmatpush1.msra.mxu0 0.0
  %1016 = vmatprep.subr.mxu0 0.0
  %1017 = vmatpush1.msra.mxu0 0.0
  %1018 = vmatprep.subr.mxu0 0.0
  %1019 = vmatpush1.msra.mxu0 0.0
  %1020 = vmatprep.subr.mxu0 0.0
  %1021 = vmatpush1.msra.mxu0 0.0
  %1022 = vmatprep.subr.mxu0 0.0
  %1023 = vmatpush1.msra.mxu0 0.0
  %1024 = vmatprep.subr.mxu0 0.0
  %1025 = vmatpush1.msra.mxu0 0.0
  %1026 = vmatprep.subr.mxu0 0.0
  %1027 = vmatpush1.msra.mxu0 0.0
  %1028 = vmatprep.subr.mxu0 0.0
  %1029 = vmatpush1.msra.mxu0 0.0
  %1030 = vmatprep.subr.mxu0 0.0
  %1031 = vmatpush1.msra.mxu0 0.0
  %1032 = vmatprep.subr.mxu0 0.0
  %1033 = vmatpush1.msra.mxu0 0.0
  %1034 = vmatprep.subr.mxu0 0.0
  %1035 = vmatpush1.msra.mxu0 0.0
  %1036 = vmatprep.subr.mxu0 0.0
  %1037 = vmatpush1.msra.mxu0 0.0
  %1038 = vmatprep.subr.mxu0 0.0
  %1039 = vmatpush1.msra.mxu0 0.0
  %1040 = vmatprep.subr.mxu0 0.0
  %1041 = vmatpush1.msra.mxu0 0.0
  %1042 = vmatprep.subr.mxu0 0.0
  %1043 = vmatpush1.msra.mxu0 0.0
  %1044 = vmatprep.subr.mxu0 0.0
  %1045 = vmatpush1.msra.mxu0 0.0
  %1046 = vmatprep.subr.mxu0 0.0
  %1047 = vmatpush1.msra.mxu0 0.0
  %1048 = vmatprep.subr.mxu0 0.0
  %1049 = vmatpush1.msra.mxu0 0.0
  %1050 = vmatprep.subr.mxu0 0.0
  %1051 = vmatpush1.msra.mxu0 0.0
  %1052 = vmatprep.subr.mxu0 0.0
  %1053 = vmatpush1.msra.mxu0 0.0
  %1054 = vmatprep.subr.mxu0 0.0
  %1055 = vmatpush1.msra.mxu0 0.0
  %1056 = vmatprep.subr.mxu0 0.0
  %1057 = vmatpush1.msra.mxu0 0.0
  %1058 = vmatprep.subr.mxu0 0.0
  %1059 = vmatpush1.msra.mxu0 0.0
  %1060 = vmatprep.subr.mxu0 0.0
  %1061 = vmatpush1.msra.mxu0 0.0
  %1062 = vmatprep.subr.mxu0 0.0
  %1063 = vmatpush1.msra.mxu0 0.0
  %1064 = vmatprep.subr.mxu0 0.0
  %1065 = vmatpush1.msra.mxu0 0.0
  %1066 = vmatprep.subr.mxu0 0.0
  %1067 = vmatpush1.msra.mxu0 0.0
  %1068 = vmatprep.subr.mxu0 0.0
  %1069 = vmatpush1.msra.mxu0 0.0
  %1070 = vmatprep.subr.mxu0 0.0
  %1071 = vmatpush1.msra.mxu0 0.0
  %1072 = vmatprep.mubr.f32.mxu0 0.0
  %1073 = vmatmul.mubr.f32.gmra.mrb[0].mxu0 %v1006
  %v1074 = vpop.f32.mrb[0].mxu0
  %v1075 = vadd.f32 0.0, %v1074
  %v1076 = vpop.f32.mrb[0].mxu0
  %1077 = vdwg.mxu0
  %v1078 = vmul.f32 %v623, %v1075
  %1079 = vmatprep.subr.mxu0 0.0
  %1080 = vmatpush1.msra.mxu0 %v1078
  %1081 = vmatprep.subr.mxu0 0.0
  %1082 = vmatpush1.msra.mxu0 0.0
  %1083 = vmatprep.subr.mxu0 0.0
  %1084 = vmatpush1.msra.mxu0 0.0
  %1085 = vmatprep.subr.mxu0 0.0
  %1086 = vmatpush1.msra.mxu0 0.0
  %1087 = vmatprep.subr.mxu0 0.0
  %1088 = vmatpush1.msra.mxu0 0.0
  %1089 = vmatprep.subr.mxu0 0.0
  %1090 = vmatpush1.msra.mxu0 0.0
  %1091 = vmatprep.subr.mxu0 0.0
  %1092 = vmatpush1.msra.mxu0 0.0
  %1093 = vmatprep.subr.mxu0 0.0
  %1094 = vmatpush1.msra.mxu0 0.0
  %1095 = vmatprep.subr.mxu0 0.0
  %1096 = vmatpush1.msra.mxu0 0.0
  %1097 = vmatprep.subr.mxu0 0.0
  %1098 = vmatpush1.msra.mxu0 0.0
  %1099 = vmatprep.subr.mxu0 0.0
  %1100 = vmatpush1.msra.mxu0 0.0
  %1101 = vmatprep.subr.mxu0 0.0
  %1102 = vmatpush1.msra.mxu0 0.0
  %1103 = vmatprep.subr.mxu0 0.0
  %1104 = vmatpush1.msra.mxu0 0.0
  %1105 = vmatprep.subr.mxu0 0.0
  %1106 = vmatpush1.msra.mxu0 0.0
  %1107 = vmatprep.subr.mxu0 0.0
  %1108 = vmatpush1.msra.mxu0 0.0
  %1109 = vmatprep.subr.mxu0 0.0
  %1110 = vmatpush1.msra.mxu0 0.0
  %1111 = vmatprep.subr.mxu0 0.0
  %1112 = vmatpush1.msra.mxu0 0.0
  %1113 = vmatprep.subr.mxu0 0.0
  %1114 = vmatpush1.msra.mxu0 0.0
  %1115 = vmatprep.subr.mxu0 0.0
  %1116 = vmatpush1.msra.mxu0 0.0
  %1117 = vmatprep.subr.mxu0 0.0
  %1118 = vmatpush1.msra.mxu0 0.0
  %1119 = vmatprep.subr.mxu0 0.0
  %1120 = vmatpush1.msra.mxu0 0.0
  %1121 = vmatprep.subr.mxu0 0.0
  %1122 = vmatpush1.msra.mxu0 0.0
  %1123 = vmatprep.subr.mxu0 0.0
  %1124 = vmatpush1.msra.mxu0 0.0
  %1125 = vmatprep.subr.mxu0 0.0
  %1126 = vmatpush1.msra.mxu0 0.0
  %1127 = vmatprep.subr.mxu0 0.0
  %1128 = vmatpush1.msra.mxu0 0.0
  %1129 = vmatprep.subr.mxu0 0.0
  %1130 = vmatpush1.msra.mxu0 0.0
  %1131 = vmatprep.subr.mxu0 0.0
  %1132 = vmatpush1.msra.mxu0 0.0
  %1133 = vmatprep.subr.mxu0 0.0
  %1134 = vmatpush1.msra.mxu0 0.0
  %1135 = vmatprep.subr.mxu0 0.0
  %1136 = vmatpush1.msra.mxu0 0.0
  %1137 = vmatprep.subr.mxu0 0.0
  %1138 = vmatpush1.msra.mxu0 0.0
  %1139 = vmatprep.subr.mxu0 0.0
  %1140 = vmatpush1.msra.mxu0 0.0
  %1141 = vmatprep.subr.mxu0 0.0
  %1142 = vmatpush1.msra.mxu0 0.0
  %1143 = vmatprep.mubr.f32.mxu0 0.0
  %1144 = vmatmul.mubr.f32.gmra.mrb[0].mxu0 %v700
  %v1145 = vpop.f32.mrb[0].mxu0
  %v1146 = vadd.f32 %v1078, %v1145
  %v1147 = vpop.f32.mrb[0].mxu0
  %1148 = vdwg.mxu0
  %v1149 = vmul.f32 %v623, %v1146
  %v1150 = vlaneseq
  %v1151 = vshrl.u32 %v1150, 7
  %v1152 = vsub.s32 3, %v1151
  %v1153 = vrot.slane %v31, %v1152
  %v1154 = vadd.f32 %v1149, %v1153
  %1155 = vst.msk [vmem:[%s8] sm:$0xff] %vm46, %v1154
  // Predicated region
  $region34: #{gnn_forward.1} parent=0 // pred_check
    _
  $region35: #{gnn_forward.1} parent=0 // pred_check_branch
    %1157 = sbr.rel (0) target = $region37
  $region36: #{gnn_forward.1} parent=0 // pred_region
    _
  $region37: #{gnn_forward.1} parent=0 // pred_fallthru
    _
  // Predicated region
  $region38: #{gnn_forward.1} parent=0 // pred_check
    _
  $region39: #{gnn_forward.1} parent=0 // pred_check_branch
    %1159 = sbr.rel (0) target = $region41
  $region40: #{gnn_forward.1} parent=0 // pred_region
    _
  $region41: #{gnn_forward.1} parent=0 // pred_fallthru
    _

</llo_original>
